<compile_context>
chip_gen: v7x
topology: tpu7x:2x2x1
jax: 0.10.0
libtpu: 0.0.40
codegen_flags: <defaults>
</compile_context>

<pallas_src>
import functools

import jax
import jax.numpy as jnp
from jax.experimental import pallas as pl
from jax.experimental.pallas import tpu as pltpu


def _round_up(n, m):
    return ((n + m - 1) // m) * m


def _default_block_b():
    # Per-generation batch tile: v5e's lower HBM BW hides the ~0.35us/step overhead at
    # smaller tiles; v6e/v7x want bigger tiles to approach their HBM roofline.
    try:
        kind = jax.devices()[0].device_kind.lower()
    except Exception:
        kind = ""
    if "v5 lite" in kind or "v5e" in kind or "v5lite" in kind:
        return 2048
    return 4096


def _ecg_head_kernel(x_ref, w1_ref, b1_ref, w2_ref, b2_ref, o_ref, *, w2_is_row):
    # In-kernel bf16 cast of the streamed activation (no-op if caller supplied bf16);
    # MXU accumulates in f32.
    x = x_ref[...].astype(jnp.bfloat16)
    h = jnp.dot(x, w1_ref[...], preferred_element_type=jnp.float32)
    h = h + b1_ref[...]
    # F.leaky_relu with default negative_slope = 0.01
    h = jnp.maximum(h, 0.01 * h)
    # dropout: eval-mode identity (no-op)
    # head_2
    if w2_is_row:
        # n_out == 1: w2_ref is (1, 128); VPU multiply + lane reduction keeps the MXU
        # free and avoids a wasteful 1-column systolic push.
        z = jnp.sum(h * w2_ref[...], axis=-1, keepdims=True)
    else:
        z = jnp.dot(h, w2_ref[...], preferred_element_type=jnp.float32)
    z = z + b2_ref[...]
    # Exact, numerically stable sigmoid: exp(-|z|) never overflows; exact divide.
    e = jnp.exp(-jnp.abs(z))
    o_ref[...] = (jnp.where(z >= 0, 1.0, e) / (1.0 + e)).astype(o_ref.dtype)


def ecg_head(x, w1, b1, w2, b2, *, block_b=None):
    """x:(B,128) f32/bf16, w1:(128,128) (bf16 preferred), b1:(1,128), w2:(128,n_out), b2:(1,n_out)."""
    B, D = x.shape
    n_out = w2.shape[1]

    if block_b is None:
        block_b = _default_block_b()

    # Grid-step count: at least 2 (and even) so both v7x TensorCores get work; tile
    # rounded to sublane granularity (8) and capped at block_b. No padding -- the ragged
    # last tile is masked by Pallas (rows are independent, so OOB rows cannot contaminate
    # kept rows).
    t = pl.cdiv(B, block_b)
    t = max(2, t + (t % 2))
    bb = max(8, min(block_b, _round_up(pl.cdiv(B, t), 8)))
    grid = pl.cdiv(B, bb)

    # Weights: accept pre-cast bf16 (parameter-load-time cast); only cast here if needed.
    w1_bf = w1 if w1.dtype == jnp.bfloat16 else w1.astype(jnp.bfloat16)

    w2_is_row = (n_out == 1)
    w2_arg = w2.reshape(1, D) if w2_is_row else w2
    w2_spec = (pl.BlockSpec((1, D), lambda i: (0, 0)) if w2_is_row
               else pl.BlockSpec((D, n_out), lambda i: (0, 0)))

    kernel = functools.partial(_ecg_head_kernel, w2_is_row=w2_is_row)

    # Advisory cost so XLA schedules/overlaps this small custom call sensibly.
    cost = pl.CostEstimate(
        flops=2 * B * D * (D + n_out),
        transcendentals=B * n_out,
        bytes_accessed=(B * D * x.dtype.itemsize          # streamed activations
                        + B * n_out * 4                   # streamed output
                        + D * D * 2 + D * 4               # resident w1 (bf16) + b1
                        + D * n_out * 4 + n_out * 4),     # resident w2 + b2
    )

    out = pl.pallas_call(
        kernel,
        out_shape=jax.ShapeDtypeStruct((B, n_out), jnp.float32),
        grid_spec=pltpu.PrefetchScalarGridSpec(
            num_scalar_prefetch=0,
            grid=(grid,),
            in_specs=[
                pl.BlockSpec((bb, D), lambda i: (i, 0)),     # x: streams per batch tile
                pl.BlockSpec((D, D), lambda i: (0, 0)),      # w1: VMEM-resident
                pl.BlockSpec((1, D), lambda i: (0, 0)),      # b1: VMEM-resident
                w2_spec,                                     # w2: VMEM-resident
                pl.BlockSpec((1, n_out), lambda i: (0, 0)),  # b2: VMEM-resident
            ],
            out_specs=pl.BlockSpec((bb, n_out), lambda i: (i, 0)),
        ),
        compiler_params=pltpu.CompilerParams(
            dimension_semantics=("parallel",),   # shard batch tiles across v7x's 2 TCs
            vmem_limit_bytes=32 * 1024 * 1024,   # explicit: safe on v5e/v6e/v7x budgets
        ),
        cost_estimate=cost,
    )(x, w1_bf, b1, w2_arg, b2)

    return out


def reference(x, w1, b1, w2, b2):
    h = x @ w1 + b1
    h = jnp.where(h > 0, h, 0.01 * h)
    z = h @ w2 + b2
    return jax.nn.sigmoid(z)


if __name__ == "__main__":
    key = jax.random.PRNGKey(0)
    k_x, k_w1, k_b1, k_w2, k_b2 = jax.random.split(key, 5)

    D = 128        # in/hidden features (fixed by the module)
    n_out = 1      # module default
    B = 16         # small example batch (wrapper scales transparently to large B)

    bound = 1.0 / jnp.sqrt(D)
    w1 = jax.random.uniform(k_w1, (D, D), jnp.float32, -bound, bound)
    b1 = jax.random.uniform(k_b1, (1, D), jnp.float32, -bound, bound)
    w2 = jax.random.uniform(k_w2, (D, n_out), jnp.float32, -bound, bound)
    b2 = jax.random.uniform(k_b2, (1, n_out), jnp.float32, -bound, bound)

    # Parameter-load-time cast: resident first-layer weight stored bf16 once,
    # not re-cast on every forward call.
    w1_bf = w1.astype(jnp.bfloat16)

    x = jax.random.normal(k_x, (B, D), dtype=jnp.float32)

    out = ecg_head(x, w1_bf, b1, w2, b2)
    jax.block_until_ready(out)
    ref = reference(x, w1, b1, w2, b2)
    assert out.shape == (B, n_out), out.shape
    # bf16 first matmul -> relaxed tolerance vs f32 reference (sigmoid is exact now)
    assert jnp.allclose(out, ref, atol=1e-2, rtol=1e-2), "mismatch vs reference (n_out=1)"

    # Ragged batch (not a multiple of the 8-row sublane tile): exercises the
    # no-pad / masked-last-tile path.
    B_r = 13
    x_r = jax.random.normal(k_x, (B_r, D), dtype=jnp.float32)
    out_r = ecg_head(x_r, w1_bf, b1, w2, b2)
    jax.block_until_ready(out_r)
    ref_r = reference(x_r, w1, b1, w2, b2)
    assert out_r.shape == (B_r, n_out), out_r.shape
    assert jnp.allclose(out_r, ref_r, atol=1e-2, rtol=1e-2), "mismatch vs reference (ragged B)"

    # Also exercise the general n_out > 1 MXU path.
    n_out2 = 4
    w2b = jax.random.uniform(k_w2, (D, n_out2), jnp.float32, -bound, bound)
    b2b = jax.random.uniform(k_b2, (1, n_out2), jnp.float32, -bound, bound)
    out2 = ecg_head(x, w1_bf, b1, w2b, b2b)
    jax.block_until_ready(out2)
    ref2 = reference(x, w1, b1, w2b, b2b)
    assert out2.shape == (B, n_out2), out2.shape
    assert jnp.allclose(out2, ref2, atol=1e-2, rtol=1e-2), "mismatch vs reference (n_out=4)"

    print("KERNEL_OK")
</pallas_src>

<mosaic_0001>
module attributes {stable_mosaic.version = 11 : i64} {
  func.func @_ecg_head_kernel(%arg0: i32, %arg1: memref<8x128xf32, #tpu.memory_space<vmem>>, %arg2: memref<128x128xbf16, #tpu.memory_space<vmem>>, %arg3: memref<1x128xf32, #tpu.memory_space<vmem>>, %arg4: memref<1x128xf32, #tpu.memory_space<vmem>>, %arg5: memref<1x1xf32, #tpu.memory_space<vmem>>, %arg6: memref<8x1xf32, #tpu.memory_space<vmem>>) attributes {dimension_semantics = [#tpu.dimension_semantics<parallel>], iteration_bounds = array<i64: 2>, scalar_prefetch = 0 : i64, scratch_operands = 0 : i64, tpu.core_type = #tpu.core_type<tc>, window_params = [{transform_indices = @transform_0, window_bounds = array<i64: 8, 128>}, {pipeline_mode = #tpu.pipeline_mode<synchronous>, transform_indices = @transform_1, window_bounds = array<i64: 128, 128>}, {pipeline_mode = #tpu.pipeline_mode<synchronous>, transform_indices = @transform_2, window_bounds = array<i64: 1, 128>}, {pipeline_mode = #tpu.pipeline_mode<synchronous>, transform_indices = @transform_3, window_bounds = array<i64: 1, 128>}, {pipeline_mode = #tpu.pipeline_mode<synchronous>, transform_indices = @transform_4, window_bounds = array<i64: 1, 1>}, {transform_indices = @transform_5, window_bounds = array<i64: 8, 1>}]} {
    %c0 = arith.constant 0 : index
    %c0_0 = arith.constant 0 : index
    %0 = vector.load %arg1[%c0, %c0_0] : memref<8x128xf32, #tpu.memory_space<vmem>>, vector<8x128xf32>
    %1 = arith.truncf %0 : vector<8x128xf32> to vector<8x128xbf16>
    %c0_1 = arith.constant 0 : index
    %c0_2 = arith.constant 0 : index
    %2 = vector.load %arg2[%c0_1, %c0_2] : memref<128x128xbf16, #tpu.memory_space<vmem>>, vector<128x128xbf16>
    %cst = arith.constant dense<0.000000e+00> : vector<8x128xf32>
    %3 = tpu.matmul %1, %2, %cst {dimension_numbers = #tpu.dot_dimension_numbers<[1], [0], [0], [1], [0, 0, 1, 1], [], []>} : vector<8x128xbf16>, vector<128x128xbf16>, vector<8x128xf32> -> vector<8x128xf32>
    %c0_3 = arith.constant 0 : index
    %c0_4 = arith.constant 0 : index
    %4 = vector.load %arg3[%c0_3, %c0_4] : memref<1x128xf32, #tpu.memory_space<vmem>>, vector<1x128xf32>
    %5 = vector.broadcast %4 : vector<1x128xf32> to vector<8x128xf32>
    %6 = arith.addf %3, %5 : vector<8x128xf32>
    %cst_5 = arith.constant 0.00999999977 : f32
    %7 = vector.broadcast %cst_5 : f32 to vector<8x128xf32>
    %8 = arith.mulf %7, %6 : vector<8x128xf32>
    %9 = arith.maximumf %6, %8 : vector<8x128xf32>
    %c0_6 = arith.constant 0 : index
    %c0_7 = arith.constant 0 : index
    %10 = vector.load %arg4[%c0_6, %c0_7] : memref<1x128xf32, #tpu.memory_space<vmem>>, vector<1x128xf32>
    %11 = vector.broadcast %10 : vector<1x128xf32> to vector<8x128xf32>
    %12 = arith.mulf %9, %11 : vector<8x128xf32>
    %cst_8 = arith.constant dense<0.000000e+00> : vector<8xf32>
    %13 = vector.multi_reduction <add>, %12, %cst_8 [1] : vector<8x128xf32> to vector<8xf32>
    %14 = vector.shape_cast %13 : vector<8xf32> to vector<8x1xf32>
    %c0_9 = arith.constant 0 : index
    %c0_10 = arith.constant 0 : index
    %15 = vector.load %arg5[%c0_9, %c0_10] : memref<1x1xf32, #tpu.memory_space<vmem>>, vector<1x1xf32>
    %16 = vector.broadcast %15 : vector<1x1xf32> to vector<8x1xf32>
    %17 = arith.addf %14, %16 : vector<8x1xf32>
    %18 = math.absf %17 : vector<8x1xf32>
    %cst_11 = arith.constant 0.000000e+00 : f32
    %19 = vector.broadcast %cst_11 : f32 to vector<8x1xf32>
    %20 = arith.subf %19, %18 : vector<8x1xf32>
    %21 = math.exp %20 : vector<8x1xf32>
    %cst_12 = arith.constant 0.000000e+00 : f32
    %22 = vector.broadcast %cst_12 : f32 to vector<8x1xf32>
    %23 = arith.cmpf oge, %17, %22 : vector<8x1xf32>
    %cst_13 = arith.constant 1.000000e+00 : f32
    %24 = vector.broadcast %cst_13 : f32 to vector<8x1xf32>
    %25 = arith.select %23, %24, %21 : vector<8x1xi1>, vector<8x1xf32>
    %cst_14 = arith.constant 1.000000e+00 : f32
    %26 = vector.broadcast %cst_14 : f32 to vector<8x1xf32>
    %27 = arith.addf %26, %21 : vector<8x1xf32>
    %28 = arith.divf %25, %27 : vector<8x1xf32>
    %c0_15 = arith.constant 0 : index
    %c0_16 = arith.constant 0 : index
    %29 = vector.load %arg6[%c0_15, %c0_16] : memref<8x1xf32, #tpu.memory_space<vmem>>, vector<8x1xf32>
    tpu.vector_store %arg6[%c0_15, %c0_16], %28 {strides = array<i32>} : memref<8x1xf32, #tpu.memory_space<vmem>>, vector<8x1xf32>,
    return
  }
  func.func @transform_0(%arg0: i32) -> (i32, i32) {
    %c0_i32 = arith.constant 0 : i32
    %c0_i32_0 = arith.constant 0 : i32
    return %arg0, %c0_i32 : i32, i32
  }
  func.func @transform_1(%arg0: i32) -> (i32, i32) {
    %c0_i32 = arith.constant 0 : i32
    %c0_i32_0 = arith.constant 0 : i32
    %c0_i32_1 = arith.constant 0 : i32
    return %c0_i32, %c0_i32_0 : i32, i32
  }
  func.func @transform_2(%arg0: i32) -> (i32, i32) {
    %c0_i32 = arith.constant 0 : i32
    %c0_i32_0 = arith.constant 0 : i32
    %c0_i32_1 = arith.constant 0 : i32
    return %c0_i32, %c0_i32_0 : i32, i32
  }
  func.func @transform_3(%arg0: i32) -> (i32, i32) {
    %c0_i32 = arith.constant 0 : i32
    %c0_i32_0 = arith.constant 0 : i32
    %c0_i32_1 = arith.constant 0 : i32
    return %c0_i32, %c0_i32_0 : i32, i32
  }
  func.func @transform_4(%arg0: i32) -> (i32, i32) {
    %c0_i32 = arith.constant 0 : i32
    %c0_i32_0 = arith.constant 0 : i32
    %c0_i32_1 = arith.constant 0 : i32
    return %c0_i32, %c0_i32_0 : i32, i32
  }
  func.func @transform_5(%arg0: i32) -> (i32, i32) {
    %c0_i32 = arith.constant 0 : i32
    %c0_i32_0 = arith.constant 0 : i32
    return %arg0, %c0_i32 : i32, i32
  }
}

</mosaic_0001>

<llo_original>
// kernel: tpu_custom_call.1
$region0: #{tpu_custom_call.1}
  #allocation0 [shape = 'u32[]', space=smem, size = 0x4, offset = 0x4, fixed_abs, tag = 'smem constant byte address 0x4 - core index']
  #allocation1 [shape = 'u32[144,128]{1,0:T(1,128)}', space=vmem, size = 0x12000, scoped, tag = 'internal scratch']
  #allocation2 [shape = 'f32[1,1]{1,0:T(1,128)S(1)}', space=vmem, size = 0x200, scoped, tag = 'scoped memory for tpu_custom_call.1']
  %s0 = inlined_call_operand.hbm [shape: f32[16,128], index: 0, kind: input, shape index: {}]
  %s1 = inlined_call_operand.hbm [shape: bf16[128,128], index: 1, kind: input, shape index: {}]
  %s2 = inlined_call_operand.vmem [shape: f32[1,128], index: 2, kind: input, shape index: {}]
  %s3 = inlined_call_operand.vmem [shape: f32[1,128], index: 3, kind: input, shape index: {}]
  %s4 = inlined_call_operand.<no memory space> [shape: f32[1,1], index: 4, kind: input, shape index: {}]
  %s5 = inlined_call_operand.vmem [shape: f32[16,1], index: 5, kind: output, shape index: {}]
  %s6 = sld [smem:[#allocation0]]
  $region61: #{tpu_custom_call.1} parent=0
    _
  %s8 = ssub.s32 1, %s6
  %s9 = scalar_select 0, %s8, %s6
  %v10 = vstv %s4
  %11 = vst [vmem:[#allocation2] sm:$0x1] %v10
  $region1: #{tpu_custom_call.1} parent=0
    #allocation3 [shape = 'u8[8192]{0}', space=vmem, size = 0x2000, scoped, tag = 'input window, operand 0']
    #allocation4 [shape = 's32[2]{0}', space=sflag, size = 0x8, scoped, tag = 'scoped memory for tpu_custom_call.1']
    #allocation5 [shape = 'u8[32768]{0}', space=vmem, size = 0x8000, scoped, tag = 'input window, operand 1, single buffered']
    #allocation6 [shape = 's32[1]{0}', space=sflag, size = 0x4, scoped, tag = 'scoped memory for tpu_custom_call.1']
    %12 = vsyncpa [#allocation4], 0
    %s13 = scalar_lea.sflag [#allocation4], 1
    %14 = vsyncpa %s13, 0
    %15 = vsyncpa [#allocation6], 0
    loop: start=0, step=1, limit=4
    $region2: #{tpu_custom_call.1} parent=1 // loop_pre_header
      _
    $region3: #{tpu_custom_call.1} parent=1 // loop_header
      %s17 = sphi 0, %s21
      %p18 = scmp.ge.s32.totalorder %s17, 4
      %s27 = sphi 0, %s29
      %s30 = sphi 0, %s27
      %s31 = sphi 0, %s30
      %s47 = sphi 0, %s31
      %s51 = sphi 0, %s51
      %s53 = sphi 0, %s51
      %s54 = sphi 0, %s53
      %s68 = sphi 0, %s54
      %s72 = sphi 0, %s72
      %s74 = sphi 0, %s72
      %s75 = sphi 0, %s74
      %s89 = sphi 0, %s75
      %s93 = sphi 0, %s93
      %s95 = sphi 0, %s93
      %s96 = sphi 0, %s95
      %s110 = sphi 0, %s96
      %s114 = sphi 0, %s114
      %s116 = sphi 0, %s114
      %s117 = sphi 0, %s116
      %s131 = sphi 0, %s117
      %s137 = sphi 0, %s139
      %s140 = sphi 0, %s137
      %s141 = sphi 0, %s140
      %s157 = sphi 0, %s141
    $region4: #{tpu_custom_call.1} parent=1 // loop_header_branch
      %20 = sbr.rel (%p18) target = $region8
    $region5: #{tpu_custom_call.1} parent=1 // loop_body
      %s22 = ssub.s32 %s17, 1
      %s23 = ssub.s32 %s17, 2
      %s24 = sadd.s32 %s17, 1
      %s25 = ssub.s32 %s17, %s24
      %p26 = scmp.eq.s32.totalorder %s25, 0
      %s28 = sadd.s32 %s27, 1
      %s29 = scalar_select %p26, %s27, %s28
      %p32 = pneg %p26
      %p33 = scmp.eq.s32.totalorder %s17, 1
      %p34 = por %p32, %p33
      %p35 = scmp.ne.s32.totalorder %s27, %s30
      %p36 = scmp.eq.s32.totalorder %s17, 0
      %p37 = por %p35, %p36
      %p38 = scmp.ne.s32.totalorder %s27, %s30
      %p39 = scmp.eq.s32.totalorder %s22, 1
      %p40 = por %p38, %p39
      %p41 = scmp.ne.s32.totalorder %s30, %s31
      %p42 = scmp.eq.s32.totalorder %s22, 0
      %p43 = por %p41, %p42
      %p44 = scmp.ne.s32.totalorder %s30, %s31
      %p45 = scmp.eq.s32.totalorder %s23, 1
      %p46 = por %p44, %p45
      %p48 = scmp.ne.s32.totalorder %s31, %s47
      %p49 = scmp.eq.s32.totalorder %s23, 0
      %p50 = por %p48, %p49
      %s52 = sadd.s32 %s51, 1
      %p55 = scmp.eq.s32.totalorder %s17, 1
      %p56 = scmp.ne.s32.totalorder %s51, %s53
      %p57 = scmp.eq.s32.totalorder %s17, 0
      %p58 = por %p56, %p57
      %p59 = scmp.ne.s32.totalorder %s51, %s53
      %p60 = scmp.eq.s32.totalorder %s22, 1
      %p61 = por %p59, %p60
      %p62 = scmp.ne.s32.totalorder %s53, %s54
      %p63 = scmp.eq.s32.totalorder %s22, 0
      %p64 = por %p62, %p63
      %p65 = scmp.ne.s32.totalorder %s53, %s54
      %p66 = scmp.eq.s32.totalorder %s23, 1
      %p67 = por %p65, %p66
      %p69 = scmp.ne.s32.totalorder %s54, %s68
      %p70 = scmp.eq.s32.totalorder %s23, 0
      %p71 = por %p69, %p70
      %s73 = sadd.s32 %s72, 1
      %p76 = scmp.eq.s32.totalorder %s17, 1
      %p77 = scmp.ne.s32.totalorder %s72, %s74
      %p78 = scmp.eq.s32.totalorder %s17, 0
      %p79 = por %p77, %p78
      %p80 = scmp.ne.s32.totalorder %s72, %s74
      %p81 = scmp.eq.s32.totalorder %s22, 1
      %p82 = por %p80, %p81
      %p83 = scmp.ne.s32.totalorder %s74, %s75
      %p84 = scmp.eq.s32.totalorder %s22, 0
      %p85 = por %p83, %p84
      %p86 = scmp.ne.s32.totalorder %s74, %s75
      %p87 = scmp.eq.s32.totalorder %s23, 1
      %p88 = por %p86, %p87
      %p90 = scmp.ne.s32.totalorder %s75, %s89
      %p91 = scmp.eq.s32.totalorder %s23, 0
      %p92 = por %p90, %p91
      %s94 = sadd.s32 %s93, 1
      %p97 = scmp.eq.s32.totalorder %s17, 1
      %p98 = scmp.ne.s32.totalorder %s93, %s95
      %p99 = scmp.eq.s32.totalorder %s17, 0
      %p100 = por %p98, %p99
      %p101 = scmp.ne.s32.totalorder %s93, %s95
      %p102 = scmp.eq.s32.totalorder %s22, 1
      %p103 = por %p101, %p102
      %p104 = scmp.ne.s32.totalorder %s95, %s96
      %p105 = scmp.eq.s32.totalorder %s22, 0
      %p106 = por %p104, %p105
      %p107 = scmp.ne.s32.totalorder %s95, %s96
      %p108 = scmp.eq.s32.totalorder %s23, 1
      %p109 = por %p107, %p108
      %p111 = scmp.ne.s32.totalorder %s96, %s110
      %p112 = scmp.eq.s32.totalorder %s23, 0
      %p113 = por %p111, %p112
      %s115 = sadd.s32 %s114, 1
      %p118 = scmp.eq.s32.totalorder %s17, 1
      %p119 = scmp.ne.s32.totalorder %s114, %s116
      %p120 = scmp.eq.s32.totalorder %s17, 0
      %p121 = por %p119, %p120
      %p122 = scmp.ne.s32.totalorder %s114, %s116
      %p123 = scmp.eq.s32.totalorder %s22, 1
      %p124 = por %p122, %p123
      %p125 = scmp.ne.s32.totalorder %s116, %s117
      %p126 = scmp.eq.s32.totalorder %s22, 0
      %p127 = por %p125, %p126
      %p128 = scmp.ne.s32.totalorder %s116, %s117
      %p129 = scmp.eq.s32.totalorder %s23, 1
      %p130 = por %p128, %p129
      %p132 = scmp.ne.s32.totalorder %s117, %s131
      %p133 = scmp.eq.s32.totalorder %s23, 0
      %p134 = por %p132, %p133
      %s135 = ssub.s32 %s17, %s24
      %p136 = scmp.eq.s32.totalorder %s135, 0
      %s138 = sadd.s32 %s137, 1
      %s139 = scalar_select %p136, %s137, %s138
      %p142 = pneg %p136
      %p143 = scmp.eq.s32.totalorder %s17, 1
      %p144 = por %p142, %p143
      %p145 = scmp.ne.s32.totalorder %s137, %s140
      %p146 = scmp.eq.s32.totalorder %s17, 0
      %p147 = por %p145, %p146
      %p148 = scmp.ne.s32.totalorder %s137, %s140
      %p149 = scmp.eq.s32.totalorder %s22, 1
      %p150 = por %p148, %p149
      %p151 = scmp.ne.s32.totalorder %s140, %s141
      %p152 = scmp.eq.s32.totalorder %s22, 0
      %p153 = por %p151, %p152
      %p154 = scmp.ne.s32.totalorder %s140, %s141
      %p155 = scmp.eq.s32.totalorder %s23, 1
      %p156 = por %p154, %p155
      %p158 = scmp.ne.s32.totalorder %s141, %s157
      %p159 = scmp.eq.s32.totalorder %s23, 0
      %p160 = por %p158, %p159
      %p161 = scmp.le.s32.totalorder 1, %s17
      %p162 = scmp.lt.s32.totalorder %s17, 3
      %p163 = pnand %p161, %p162
      %p164 = pneg %p163
      // Predicated region
      $region9: #{tpu_custom_call.1} parent=5 // pred_check
        _
      $region10: #{tpu_custom_call.1} parent=5 // pred_check_branch
        %166 = sbr.rel (%p163) target = $region12
      $region11: #{tpu_custom_call.1} parent=5 // pred_region
        %s167 = ssub.s32 %s17, 1
        // Predicated region
        $region13: #{tpu_custom_call.1} parent=11 // pred_check
          %p168 = pneg %p64
        $region14: #{tpu_custom_call.1} parent=11 // pred_check_branch
          %170 = sbr.rel (%p168) target = $region16
        $region15: #{tpu_custom_call.1} parent=11 // pred_region
          %s172 = ssub.s32 1024, 1024
          %173 = vsyncadd [#allocation6], %s172
          %s174 = sshll.u32 [#allocation5], 4
          %s175 = int_to_ptr.vmem [resolvable:$true] %s174
          %180 = dma.hbm_to_vmem [thread:$0]  %s1, 1024, %s175, [#allocation6], 64, 64, 4
        $region16: #{tpu_custom_call.1} parent=11 // pred_fallthru
          _
        // Predicated region
        $region17: #{tpu_custom_call.1} parent=11 // pred_check
          %p181 = pneg %p85
        $region18: #{tpu_custom_call.1} parent=11 // pred_check_branch
          %183 = sbr.rel (%p181) target = $region20
        $region19: #{tpu_custom_call.1} parent=11 // pred_region
          _
        $region20: #{tpu_custom_call.1} parent=11 // pred_fallthru
          _
        // Predicated region
        $region21: #{tpu_custom_call.1} parent=11 // pred_check
          %p184 = pneg %p106
        $region22: #{tpu_custom_call.1} parent=11 // pred_check_branch
          %186 = sbr.rel (%p184) target = $region24
        $region23: #{tpu_custom_call.1} parent=11 // pred_region
          _
        $region24: #{tpu_custom_call.1} parent=11 // pred_fallthru
          _
        // Predicated region
        $region25: #{tpu_custom_call.1} parent=11 // pred_check
          %p187 = pneg %p127
        $region26: #{tpu_custom_call.1} parent=11 // pred_check_branch
          %189 = sbr.rel (%p187) target = $region28
        $region27: #{tpu_custom_call.1} parent=11 // pred_region
          _
        $region28: #{tpu_custom_call.1} parent=11 // pred_fallthru
          _
      $region12: #{tpu_custom_call.1} parent=5 // pred_fallthru
        _
      %p190 = scmp.lt.s32.totalorder %s17, 2
      // Predicated region
      $region29: #{tpu_custom_call.1} parent=5 // pred_check
        %p191 = pneg %p190
      $region30: #{tpu_custom_call.1} parent=5 // pred_check_branch
        %193 = sbr.rel (%p191) target = $region32
      $region31: #{tpu_custom_call.1} parent=5 // pred_region
        // Predicated region
        $region33: #{tpu_custom_call.1} parent=31 // pred_check
          %p194 = pneg %p37
        $region34: #{tpu_custom_call.1} parent=31 // pred_check_branch
          %196 = sbr.rel (%p194) target = $region36
        $region35: #{tpu_custom_call.1} parent=31 // pred_region
          %s197 = sand.u32 %s27, 1
          %s198 = scalar_lea.sflag [#allocation4], %s197
          %s199 = sand.u32 %s27, 1
          %s200 = smul.addr %s199, 8
          %s201 = scalar_lea.vmem [#allocation3], %s200
          %s203 = ssub.s32 128, 128
          %204 = vsyncadd %s198, %s203
          %s205 = smul.addr %s17, 128
          %s206 = scalar_lea.hbm %s0, %s205
          %s208 = sshll.u32 %s201, 4
          %s209 = int_to_ptr.vmem [resolvable:$true] %s208
          %211 = dma.hbm_to_vmem [thread:$0]  %s206, 128, %s209, %s198
        $region36: #{tpu_custom_call.1} parent=31 // pred_fallthru
          _
      $region32: #{tpu_custom_call.1} parent=5 // pred_fallthru
        _
      %p212 = scmp.le.s32.totalorder 1, %s17
      %p213 = scmp.lt.s32.totalorder %s17, 3
      %p214 = pnand %p212, %p213
      %p215 = pneg %p214
      // Predicated region
      $region37: #{tpu_custom_call.1} parent=5 // pred_check
        _
      $region38: #{tpu_custom_call.1} parent=5 // pred_check_branch
        %217 = sbr.rel (%p214) target = $region40
      $region39: #{tpu_custom_call.1} parent=5 // pred_region
        %s218 = ssub.s32 %s17, 1
        %s219 = sand.u32 %s30, 1
        %s220 = scalar_lea.sflag [#allocation4], %s219
        %s221 = sand.u32 %s30, 1
        %s222 = smul.addr %s221, 8
        %s223 = scalar_lea.vmem [#allocation3], %s222
        // Predicated region
        $region41: #{tpu_custom_call.1} parent=39 // pred_check
          %p224 = pneg %p43
        $region42: #{tpu_custom_call.1} parent=39 // pred_check_branch
          %226 = sbr.rel (%p224) target = $region44
        $region43: #{tpu_custom_call.1} parent=39 // pred_region
          %227 = dma.done %s220, 128
        $region44: #{tpu_custom_call.1} parent=39 // pred_fallthru
          _
        // Predicated region
        $region45: #{tpu_custom_call.1} parent=39 // pred_check
          %p228 = pneg %p64
        $region46: #{tpu_custom_call.1} parent=39 // pred_check_branch
          %230 = sbr.rel (%p228) target = $region48
        $region47: #{tpu_custom_call.1} parent=39 // pred_region
          %231 = dma.done [#allocation6], 1024
        $region48: #{tpu_custom_call.1} parent=39 // pred_fallthru
          _
        %s232 = sand.u32 %s30, 1
        %s233 = scalar_lea.sflag [#allocation4], %s232
        %s234 = sand.u32 %s30, 1
        %s235 = smul.addr %s234, 8
        %s236 = scalar_lea.vmem [#allocation3], %s235
        %p237 = pneg %p43
        %p238 = pneg %p40
        %p239 = pneg %p64
        %p240 = pneg %p61
        %p241 = pneg %p85
        %p242 = pneg %p82
        %p243 = pneg %p106
        %p244 = pneg %p103
        %p245 = pneg %p127
        %p246 = pneg %p124
        %p247 = pneg %p153
        %p248 = pneg %p150
        %p249 = scmp.lt.s32.totalorder %s22, 1
        %s250 = scalar_select %p249, %s22, 1
        %s251 = smul.addr %s250, 8
        %s252 = scalar_lea.vmem %s5, %s251
        %p253 = scmp.lt.s32.totalorder %s22, 1
        %s254 = scalar_select %p253, %s22, 1
        %s255 = smul.addr %s254, 8
        %s256 = scalar_lea.vmem %s5, %s255
        %v258 = vld [vmem:[%s223] sm:$0xff]
        %v259 = vpack.c.bf16 %v258, %v258
        %v260 = vld [vmem:[#allocation5] sm:$0xf]
        %v261 = vld [vmem:[#allocation5 + $0x4] sm:$0xf]
        %v262 = vld [vmem:[#allocation5 + $0x8] sm:$0xf]
        %v263 = vld [vmem:[#allocation5 + $0xc] sm:$0xf]
        %v264 = vld [vmem:[#allocation5 + $0x10] sm:$0xf]
        %v265 = vld [vmem:[#allocation5 + $0x14] sm:$0xf]
        %v266 = vld [vmem:[#allocation5 + $0x18] sm:$0xf]
        %v267 = vld [vmem:[#allocation5 + $0x1c] sm:$0xf]
        %v268 = vld [vmem:[#allocation5 + $0x20] sm:$0xf]
        %v269 = vld [vmem:[#allocation5 + $0x24] sm:$0xf]
        %v270 = vld [vmem:[#allocation5 + $0x28] sm:$0xf]
        %v271 = vld [vmem:[#allocation5 + $0x2c] sm:$0xf]
        %v272 = vld [vmem:[#allocation5 + $0x30] sm:$0xf]
        %v273 = vld [vmem:[#allocation5 + $0x34] sm:$0xf]
        %v274 = vld [vmem:[#allocation5 + $0x38] sm:$0xf]
        %v275 = vld [vmem:[#allocation5 + $0x3c] sm:$0xf]
        %v276 = vld [vmem:[%s2] sm:$0x1]
        %v278 = vlaneseq
        %v279 = vshrl.u32 %v278, 7
        %v280 = vsub.s32 0, %v279
        %v281 = vrot.slane %v276, %v280
        %v299 = vunpack.c.l.b16 %v260
        %v300 = vunpack.c.l.b16 %v261
        %v301 = vunpack.c.l.b16 %v262
        %v302 = vunpack.c.l.b16 %v263
        %v303 = vunpack.c.l.b16 %v264
        %v304 = vunpack.c.l.b16 %v265
        %v305 = vunpack.c.l.b16 %v266
        %v306 = vunpack.c.l.b16 %v267
        %v307 = vunpack.c.l.b16 %v268
        %v308 = vunpack.c.l.b16 %v269
        %v309 = vunpack.c.l.b16 %v270
        %v310 = vunpack.c.l.b16 %v271
        %v311 = vunpack.c.l.b16 %v272
        %v312 = vunpack.c.l.b16 %v273
        %v313 = vunpack.c.l.b16 %v274
        %v314 = vunpack.c.l.b16 %v275
        %v315 = vpack.c.b16 %v300, %v299
        %v316 = vpack.c.b16 %v302, %v301
        %v317 = vpack.c.b16 %v304, %v303
        %v318 = vpack.c.b16 %v306, %v305
        %v319 = vpack.c.b16 %v308, %v307
        %v320 = vpack.c.b16 %v310, %v309
        %v321 = vpack.c.b16 %v312, %v311
        %v322 = vpack.c.b16 %v314, %v313
        %331 = vmatprep.subr.bf16.mxu0 0
        %332 = vmatpush1.bf16.msra.mxu0 %v315
        %333 = vmatprep.subr.bf16.mxu0 0
        %334 = vmatpush1.bf16.msra.mxu0 %v316
        %335 = vmatprep.subr.bf16.mxu0 0
        %336 = vmatpush1.bf16.msra.mxu0 %v317
        %337 = vmatprep.subr.bf16.mxu0 0
        %338 = vmatpush1.bf16.msra.mxu0 %v318
        %339 = vmatprep.subr.bf16.mxu0 0
        %340 = vmatpush1.bf16.msra.mxu0 %v319
        %341 = vmatprep.subr.bf16.mxu0 0
        %342 = vmatpush1.bf16.msra.mxu0 %v320
        %343 = vmatprep.subr.bf16.mxu0 0
        %344 = vmatpush1.bf16.msra.mxu0 %v321
        %345 = vmatprep.subr.bf16.mxu0 0
        %346 = vmatpush1.bf16.msra.mxu0 %v322
        %347 = vmatprep.subr.bf16.mxu0 0
        %348 = vmatpush1.bf16.msra.mxu0 0
        %349 = vmatprep.subr.bf16.mxu0 0
        %350 = vmatpush1.bf16.msra.mxu0 0
        %351 = vmatprep.subr.bf16.mxu0 0
        %352 = vmatpush1.bf16.msra.mxu0 0
        %353 = vmatprep.subr.bf16.mxu0 0
        %354 = vmatpush1.bf16.msra.mxu0 0
        %355 = vmatprep.subr.bf16.mxu0 0
        %356 = vmatpush1.bf16.msra.mxu0 0
        %357 = vmatprep.subr.bf16.mxu0 0
        %358 = vmatpush1.bf16.msra.mxu0 0
        %359 = vmatprep.subr.bf16.mxu0 0
        %360 = vmatpush1.bf16.msra.mxu0 0
        %361 = vmatprep.subr.bf16.mxu0 0
        %362 = vmatpush1.bf16.msra.mxu0 0
        %363 = vmatprep.mubr.bf16.mxu0 0
        %364 = vmatmul.mubr.bf16.gmra.mrb[0].mxu0 %v259
        %v365 = vpop.f32.mrb[0].mxu0
        %v366 = vadd.f32 %v281, %v365
        %v367 = vpop.f32.mrb[0].mxu0
        %v368 = vpop.f32.mrb[0].mxu0
        %v369 = vpop.f32.mrb[0].mxu0
        %370 = vdwg.mxu0
        %v371 = vmul.f32 %v366, 0.01
        %v372 = vmax.f32 %v366, %v371
        %v373 = vld [vmem:[%s3] sm:$0x1]
        %v375 = vlaneseq
        %v376 = vshrl.u32 %v375, 7
        %v377 = vsub.s32 0, %v376
        %v378 = vrot.slane %v373, %v377
        %v380 = vmul.f32 %v372, %v378
        %381 = vadd.xlane.f32.xlu0 %v380
        %v382 = vpop.xlane.xlu0 %381
        %v383 = vld [vmem:[#allocation2] sm:$0x1]
        %v385 = vlaneseq
        %v386 = vshrl.u32 %v385, 7
        %v387 = vsub.s32 0, %v386
        %v388 = vrot.slane %v383, %v387
        %v390 = vadd.f32 %v382, %v388
        %v391 = vand.u32 2147483647, %v390
        %v392 = vsub.f32 0.0, %v391
        %v393 = vmul.f32 %v392, 1.442695
        %v394 = vpow.pop %v393
        %vm395 = vcmp.ge.f32.partialorder %v390, 0.0
        %v396 = vsel %vm395, 1.0, %v394
        %v397 = vadd.f32 %v394, 1.0
        %v398 = vrcp.pop %v397
        %v399 = vmul.f32 %v396, %v398
        %vm400 = vcmask 7168
        %401 = vst.msk [vmem:[%s256] sm:$0xff] %vm400, %v399
        %p402 = scmp.lt.s32.totalorder %s22, 1
        %s403 = scalar_select %p402, %s22, 1
        %s404 = smul.addr %s403, 8
        %s405 = scalar_lea.vmem %s5, %s404
        // Predicated region
        $region49: #{tpu_custom_call.1} parent=39 // pred_check
          %p406 = pneg %p150
        $region50: #{tpu_custom_call.1} parent=39 // pred_check_branch
          %408 = sbr.rel (%p406) target = $region52
        $region51: #{tpu_custom_call.1} parent=39 // pred_region
          _
        $region52: #{tpu_custom_call.1} parent=39 // pred_fallthru
          _
      $region40: #{tpu_custom_call.1} parent=5 // pred_fallthru
        _
      %p409 = scmp.le.s32.totalorder 2, %s17
      // Predicated region
      $region53: #{tpu_custom_call.1} parent=5 // pred_check
        %p410 = pneg %p409
      $region54: #{tpu_custom_call.1} parent=5 // pred_check_branch
        %412 = sbr.rel (%p410) target = $region56
      $region55: #{tpu_custom_call.1} parent=5 // pred_region
        %s413 = ssub.s32 %s17, 2
        // Predicated region
        $region57: #{tpu_custom_call.1} parent=55 // pred_check
          %p414 = pneg %p156
        $region58: #{tpu_custom_call.1} parent=55 // pred_check_branch
          %416 = sbr.rel (%p414) target = $region60
        $region59: #{tpu_custom_call.1} parent=55 // pred_region
          %p417 = scmp.lt.s32.totalorder %s23, 1
          %s418 = scalar_select %p417, %s23, 1
          %s419 = smul.addr %s418, 8
          %s420 = scalar_lea.vmem %s5, %s419
        $region60: #{tpu_custom_call.1} parent=55 // pred_fallthru
          _
      $region56: #{tpu_custom_call.1} parent=5 // pred_fallthru
        _
    $region6: #{tpu_custom_call.1} parent=1 // loop_footer
      %s21 = sadd.s32 1, %s17
    $region7: #{tpu_custom_call.1} parent=1 // loop_footer_branch
      %16 = sbr.rel target = $region3
    $region8: #{tpu_custom_call.1} parent=1 // loop_exit
      _
    %421 = vsyncpa [#allocation4], 1
    %s422 = scalar_lea.sflag [#allocation4], 1
    %423 = vsyncpa %s422, 1
    %424 = vsyncpa [#allocation6], 1

</llo_original>
